<compile_context>
chip_gen: v5e
topology: v5e:2x2
jax: 0.10.0
libtpu: 0.0.40
codegen_flags: <defaults>
</compile_context>

<pallas_src>
import jax
import jax.numpy as jnp
import numpy as np
from jax.experimental import pallas as pl
from jax.experimental.pallas import tpu as pltpu


def _bias_add_kernel(bias_ref, qk_ref, out_ref):
    # bias_ref: (1, tn)   -- precomputed (embedding + scale), grid-invariant
    # qk_ref  : (bt, tn)  -- a (batch-tile, lane-tile) block of flattened qk
    # out_ref : (bt, tn)
    out_ref[...] = qk_ref[...] + bias_ref[...]


def _choose_tiles(B, M, itemsize, target_bytes=4 * 1024 * 1024):
    """Pick (bt, tn) so a qk block is ~target_bytes and (8,128)-legal."""
    # ---- lane (last) axis: multiple of 128, or the full extent ------------
    if M % 128 == 0:
        max_tn = max(128, (target_bytes // itemsize) // 128 * 128)
        g = pl.cdiv(M, min(M, max_tn))          # number of lane blocks
        tn = min(M, ((M + g - 1) // g + 127) // 128 * 128)
    else:
        tn = M                                  # full extent; tail vreg masked
    # ---- batch (sublane) axis ----------------------------------------------
    rows = max(1, target_bytes // max(tn * itemsize, 1))
    if rows >= B:
        bt = B                                  # whole batch in one block
    else:
        bt = min(B, max(8, (rows // 8) * 8))    # sublane alignment (8) when < B
        if bt != B:
            while B % bt and bt > 8:            # prefer bt | B (no masked block)
                bt -= 8
    return bt, tn


def spatial_relative_position_bias(qk_dots, rp_buckets, emb_weight, scale):
    """qk_dots: (B, H, I, J); rp_buckets: (>=I, >=J) int; emb_weight: (nb, H)."""
    B, H, I, J = qk_dots.shape
    N = I * J
    M = H * N
    itemsize = jnp.dtype(qk_dots.dtype).itemsize

    # --- grid-invariant bias, built directly head-major (H, N) --------------
    buckets = rp_buckets[:I, :J].reshape(-1)                     # (N,)
    bias = jnp.take(emb_weight.T, buckets, axis=1)               # (H, N)
    bias = bias + jnp.asarray(scale, bias.dtype)
    bias = bias.astype(qk_dots.dtype).reshape(1, M)              # (1, H*N)

    # --- lane-dense 2-D flatten: (B, H*N). No padding, no post-slice. -------
    qk_flat = qk_dots.reshape(B, M)

    bt, tn = _choose_tiles(B, M, itemsize)
    grid_m = pl.cdiv(M, tn)
    grid_b = pl.cdiv(B, bt)

    # Explicit scoped-VMEM budget: 2x qk-in + 2x out + 2x bias buffers.
    block_bytes = bt * tn * itemsize
    vmem_need = 4 * block_bytes + 2 * tn * itemsize
    vmem_limit = int(min(max(2 * vmem_need, 8 << 20), 48 << 20))

    out_flat = pl.pallas_call(
        _bias_add_kernel,
        out_shape=jax.ShapeDtypeStruct((B, M), qk_flat.dtype),
        grid_spec=pltpu.PrefetchScalarGridSpec(
            num_scalar_prefetch=0,
            # Lane tiles OUTER, batch tiles INNER -> bias block index constant
            # across consecutive steps (fetched grid_m times, not grid_m*grid_b).
            grid=(grid_m, grid_b),
            in_specs=[
                pl.BlockSpec((1, tn), lambda m, b: (0, m)),    # bias (invariant per m)
                pl.BlockSpec((bt, tn), lambda m, b: (b, m)),   # qk tile
            ],
            out_specs=pl.BlockSpec((bt, tn), lambda m, b: (b, m)),
        ),
        compiler_params=pltpu.CompilerParams(
            dimension_semantics=("parallel", "parallel"),
            vmem_limit_bytes=vmem_limit,
        ),
        input_output_aliases={1: 0},   # qk_flat -> out (shapes identical, no pad)
    )(bias, qk_flat)

    return out_flat.reshape(B, H, I, J)


if __name__ == "__main__":
    key = jax.random.PRNGKey(0)
    k_qk, k_emb, k_buck = jax.random.split(key, 3)

    # Small shapes consistent with the module's forward.
    B, H, I, J = 2, 8, 16, 16
    num_buckets = 32
    scale = 0.125

    qk_dots = jax.random.normal(k_qk, (B, H, I, J), dtype=jnp.float32)
    # Embedding(num_buckets, heads) weight.
    emb_weight = jax.random.normal(k_emb, (num_buckets, H), dtype=jnp.float32) * 0.02
    # spatial_dist_matrix buffer: precomputed bucket ids (larger than IxJ, gets sliced).
    spatial_dist_matrix = jax.random.randint(
        k_buck, (32, 32), minval=0, maxval=num_buckets, dtype=jnp.int32)

    # Pure-JAX reference (embedding lookup + broadcast add), computed first.
    rp = spatial_dist_matrix[:I, :J]
    values = emb_weight[rp]                        # (I, J, H)
    bias = jnp.transpose(values, (2, 0, 1))[None]  # (1, H, I, J)
    ref = qk_dots + (bias + scale)
    ref = jax.block_until_ready(ref)

    out = spatial_relative_position_bias(qk_dots, spatial_dist_matrix, emb_weight, scale)
    out = jax.block_until_ready(out)

    np.testing.assert_allclose(np.asarray(out), np.asarray(ref), rtol=1e-5, atol=1e-5)

    print("KERNEL_OK")
</pallas_src>

<mosaic_0001>
module attributes {stable_mosaic.version = 11 : i64} {
  func.func @_bias_add_kernel(%arg0: i32, %arg1: i32, %arg2: memref<1x2048xf32, #tpu.memory_space<vmem>>, %arg3: memref<2x2048xf32, #tpu.memory_space<vmem>>, %arg4: memref<2x2048xf32, #tpu.memory_space<vmem>>) attributes {dimension_semantics = [#tpu.dimension_semantics<parallel>, #tpu.dimension_semantics<parallel>], iteration_bounds = array<i64: 1, 1>, scalar_prefetch = 0 : i64, scratch_operands = 0 : i64, tpu.core_type = #tpu.core_type<tc>, window_params = [{transform_indices = @transform_0, window_bounds = array<i64: 1, 2048>}, {transform_indices = @transform_1, window_bounds = array<i64: 2, 2048>}, {transform_indices = @transform_2, window_bounds = array<i64: 2, 2048>}]} {
    %c0 = arith.constant 0 : index
    %c0_0 = arith.constant 0 : index
    %0 = vector.load %arg3[%c0, %c0_0] : memref<2x2048xf32, #tpu.memory_space<vmem>>, vector<2x2048xf32>
    %c0_1 = arith.constant 0 : index
    %c0_2 = arith.constant 0 : index
    %1 = vector.load %arg2[%c0_1, %c0_2] : memref<1x2048xf32, #tpu.memory_space<vmem>>, vector<1x2048xf32>
    %2 = vector.broadcast %1 : vector<1x2048xf32> to vector<2x2048xf32>
    %3 = arith.addf %0, %2 : vector<2x2048xf32>
    %c0_3 = arith.constant 0 : index
    %c0_4 = arith.constant 0 : index
    %4 = vector.load %arg4[%c0_3, %c0_4] : memref<2x2048xf32, #tpu.memory_space<vmem>>, vector<2x2048xf32>
    tpu.vector_store %arg4[%c0_3, %c0_4], %3 {strides = array<i32>} : memref<2x2048xf32, #tpu.memory_space<vmem>>, vector<2x2048xf32>,
    return
  }
  func.func @transform_0(%arg0: i32, %arg1: i32) -> (i32, i32) {
    %c0_i32 = arith.constant 0 : i32
    %c0_i32_0 = arith.constant 0 : i32
    return %c0_i32, %arg0 : i32, i32
  }
  func.func @transform_1(%arg0: i32, %arg1: i32) -> (i32, i32) {
    %c0_i32 = arith.constant 0 : i32
    return %arg1, %arg0 : i32, i32
  }
  func.func @transform_2(%arg0: i32, %arg1: i32) -> (i32, i32) {
    %c0_i32 = arith.constant 0 : i32
    return %arg1, %arg0 : i32, i32
  }
}

</mosaic_0001>

<llo_original>
// kernel: tpu_custom_call.1
$region0: #{tpu_custom_call.1}
  #allocation0 [shape = 'u32[]', space=smem, size = 0x4, offset = 0x4, fixed_abs, tag = 'smem constant byte address 0x4 - core index']
  #allocation1 [shape = 'u32[72,128]{1,0:T(1,128)}', space=vmem, size = 0x9000, scoped, tag = 'internal scratch']
  %s0 = inlined_call_operand.vmem [shape: f32[1,2048], index: 0, kind: input, shape index: {}]
  %s1 = inlined_call_operand.hbm [shape: f32[2,2048], index: 1, kind: input, shape index: {}, may-alias: {1,2}]
  %s2 = inlined_call_operand.hbm [shape: f32[2,2048], index: 2, kind: output, shape index: {}, may-alias: {1,2}]
  %s3 = sld [smem:[#allocation0]]
  $region22: #{tpu_custom_call.1} parent=0
    _
  %s5 = ssub.s32 1, %s3
  %s6 = scalar_select 0, %s5, %s3
  $region1: #{tpu_custom_call.1} parent=0
    #allocation2 [shape = 'u8[16384]{0}', space=vmem, size = 0x4000, scoped, tag = 'input window, operand 1, single buffered']
    #allocation3 [shape = 's32[1]{0}', space=sflag, size = 0x4, scoped, tag = 'scoped memory for tpu_custom_call.1']
    #allocation4 [shape = 's32[1]{0}', space=sflag, size = 0x4, scoped, tag = 'scoped memory for tpu_custom_call.1']
    #allocation5 [shape = 'u8[16384]{0}', space=vmem, size = 0x4000, scoped, tag = 'output window, operand 0, single buffered']
    %7 = vsyncpa [#allocation3], 0
    %8 = vsyncpa [#allocation4], 0
    // Predicated region
    $region2: #{tpu_custom_call.1} parent=1 // pred_check
      _
    $region3: #{tpu_custom_call.1} parent=1 // pred_check_branch
      %10 = sbr.rel (0) target = $region5
    $region4: #{tpu_custom_call.1} parent=1 // pred_region
      _
    $region5: #{tpu_custom_call.1} parent=1 // pred_fallthru
      _
    // Predicated region
    $region6: #{tpu_custom_call.1} parent=1 // pred_check
      _
    $region7: #{tpu_custom_call.1} parent=1 // pred_check_branch
      %12 = sbr.rel (0) target = $region9
    $region8: #{tpu_custom_call.1} parent=1 // pred_region
      %14 = vsyncadd [#allocation3], 0
      %s16 = sshll.u32 %s1, 4
      %s17 = int_to_ptr.hbm [resolvable:$true] %s16
      %s18 = sshll.u32 [#allocation2], 4
      %s19 = int_to_ptr.vmem [resolvable:$true] %s18
      %21 = dma.hbm_to_vmem [thread:$0]  %s17, 512, %s19, [#allocation3]
    $region9: #{tpu_custom_call.1} parent=1 // pred_fallthru
      _
    // Predicated region
    $region10: #{tpu_custom_call.1} parent=1 // pred_check
      _
    $region11: #{tpu_custom_call.1} parent=1 // pred_check_branch
      %23 = sbr.rel (0) target = $region13
    $region12: #{tpu_custom_call.1} parent=1 // pred_region
      %25 = dma.done [#allocation3], 512
    $region13: #{tpu_custom_call.1} parent=1 // pred_fallthru
      _
    %v26 = vld [vmem:[#allocation2] sm:$0xff]
    %v27 = vld [vmem:[#allocation2 + $0x8] sm:$0xff]
    %v28 = vld [vmem:[#allocation2 + $0x10] sm:$0xff]
    %v29 = vld [vmem:[#allocation2 + $0x18] sm:$0xff]
    %v30 = vld [vmem:[%s0] sm:$0xff]
    %v31 = vld [vmem:[%s0 + $0x8] sm:$0xff]
    %v34 = vperm.slane %v30, 0
    %v35 = vperm.slane %v30, 1
    %v36 = vperm.slane %v30, 2
    %v37 = vperm.slane %v30, 3
    %v38 = vperm.slane %v30, 4
    %v39 = vperm.slane %v30, 5
    %v40 = vperm.slane %v30, 6
    %v41 = vperm.slane %v30, 7
    %v42 = vperm.slane %v31, 0
    %v43 = vperm.slane %v31, 1
    %v44 = vperm.slane %v31, 2
    %v45 = vperm.slane %v31, 3
    %v46 = vperm.slane %v31, 4
    %v47 = vperm.slane %v31, 5
    %v48 = vperm.slane %v31, 6
    %v49 = vperm.slane %v31, 7
    %v50 = vrot.slane %v35, 6
    %v51 = vrot.slane %v36, 4
    %v52 = vrot.slane %v37, 2
    %v53 = vrot.slane %v39, 6
    %v54 = vrot.slane %v40, 4
    %v55 = vrot.slane %v41, 2
    %v56 = vrot.slane %v43, 6
    %v57 = vrot.slane %v44, 4
    %v58 = vrot.slane %v45, 2
    %v59 = vrot.slane %v47, 6
    %v60 = vrot.slane %v48, 4
    %v61 = vrot.slane %v49, 2
    %vm62 = vcmask 1041408
    %v63 = vsel %vm62, %v34, %v50
    %vm64 = vcmask 1045508
    %v65 = vsel %vm64, %v51, %v52
    %vm66 = vcmask 1043456
    %v67 = vsel %vm66, %v63, %v65
    %v68 = vsel %vm62, %v38, %v53
    %v69 = vsel %vm64, %v54, %v55
    %v70 = vsel %vm66, %v68, %v69
    %v71 = vsel %vm62, %v42, %v56
    %v72 = vsel %vm64, %v57, %v58
    %v73 = vsel %vm66, %v71, %v72
    %v74 = vsel %vm62, %v46, %v59
    %v75 = vsel %vm64, %v60, %v61
    %v76 = vsel %vm66, %v74, %v75
    %v81 = vadd.f32 %v26, %v67
    %v82 = vadd.f32 %v27, %v70
    %v83 = vadd.f32 %v28, %v73
    %v84 = vadd.f32 %v29, %v76
    %85 = vst [vmem:[#allocation5] sm:$0xff] %v81
    %86 = vst [vmem:[#allocation5 + $0x8] sm:$0xff] %v82
    %87 = vst [vmem:[#allocation5 + $0x10] sm:$0xff] %v83
    %88 = vst [vmem:[#allocation5 + $0x18] sm:$0xff] %v84
    // Predicated region
    $region14: #{tpu_custom_call.1} parent=1 // pred_check
      _
    $region15: #{tpu_custom_call.1} parent=1 // pred_check_branch
      %90 = sbr.rel (0) target = $region17
    $region16: #{tpu_custom_call.1} parent=1 // pred_region
      %92 = vsyncadd [#allocation4], 0
      %s94 = sshll.u32 [#allocation5], 4
      %s95 = int_to_ptr.vmem [resolvable:$true] %s94
      %s96 = sshll.u32 %s2, 4
      %s97 = int_to_ptr.hbm [resolvable:$true] %s96
      %99 = dma.vmem_to_hbm [thread:$0]  %s95, 512, %s97, [#allocation4]
    $region17: #{tpu_custom_call.1} parent=1 // pred_fallthru
      _
    // Predicated region
    $region18: #{tpu_custom_call.1} parent=1 // pred_check
      _
    $region19: #{tpu_custom_call.1} parent=1 // pred_check_branch
      %101 = sbr.rel (0) target = $region21
    $region20: #{tpu_custom_call.1} parent=1 // pred_region
      %103 = dma.done [#allocation4], 512
    $region21: #{tpu_custom_call.1} parent=1 // pred_fallthru
      _
    %104 = vsyncpa [#allocation3], 1
    %105 = vsyncpa [#allocation4], 1

</llo_original>
